<compile_context>
chip_gen: v5e
topology: v5e:2x2
jax: 0.10.0
libtpu: 0.0.40
codegen_flags: <defaults>
</compile_context>

<pallas_src>
import jax
import jax.numpy as jnp
from jax.experimental import pallas as pl
from jax.experimental.pallas import tpu as pltpu


_MIB = 1024 * 1024


def _vmem_budget_bytes():
    """Usable VMEM budget for this chip generation (physical minus headroom)."""
    phys = 64 * _MIB  # conservative default = v7x per-TensorCore VMEM
    try:
        phys = int(pltpu.get_tpu_info().vmem_capacity_bytes)
    except Exception:
        pass
    return max(phys - 16 * _MIB, 16 * _MIB)


def _tile_candidates(dim, preferred, gran):
    """Descending list of legal tile sizes: multiples of `gran` that divide `dim`,
    capped at `preferred`.  Falls back to the full dimension (always legal)."""
    cands = []
    t = (min(preferred, dim) // gran) * gran
    while t >= gran:
        if dim % t == 0:
            cands.append(t)
        t -= gran
    if not cands:
        # TODO(synk): pad ragged dims instead of full-extent fallback for very large
        # dims with no gran-multiple divisor (can exceed VMEM in pathological cases).
        cands = [dim]
    return cands


# --------------------------------------------------------------------------------------
# Kernels (weight always presented as [K, N]).
# --------------------------------------------------------------------------------------
def _linear_noacc_kernel(x_ref, w_ref, o_ref):
    # Single K step: write the MXU result straight to the output tile (no acc round-trip).
    o_ref[...] = jnp.dot(
        x_ref[...], w_ref[...], preferred_element_type=jnp.float32
    ).astype(o_ref.dtype)


def _linear_acc_kernel(x_ref, w_ref, o_ref, acc_ref):
    # Grid = (M//tm, N//tn, K//tk); K is the innermost reduction axis ("arbitrary").
    @pl.when(pl.program_id(2) == 0)
    def _():
        acc_ref[...] = jnp.zeros_like(acc_ref)

    acc_ref[...] += jnp.dot(
        x_ref[...], w_ref[...], preferred_element_type=jnp.float32
    )

    @pl.when(pl.program_id(2) == pl.num_programs(2) - 1)
    def _():
        o_ref[...] = acc_ref[...].astype(o_ref.dtype)


# --------------------------------------------------------------------------------------
# Wrapper
# --------------------------------------------------------------------------------------
def single_parameter_module_forward(
    x,
    weight,
    *,
    weight_is_transposed=False,
    compute_dtype=None,
    tile_sizes=None,
    small_path_max_bytes=2 * _MIB,
):
    """Forward of SingleParameterModule: out = x @ weight.T (no bias).

    x:      [batch, input_size]
    weight: [hidden_size, input_size]  (PyTorch convention), or [input_size, hidden_size]
            when weight_is_transposed=True.
    compute_dtype: optional reduced-precision MXU dtype (e.g. jnp.bfloat16); accumulation
            stays in f32 and the output keeps x.dtype.
    """
    M, K = x.shape
    if weight_is_transposed:
        wk, N = weight.shape
    else:
        N, wk = weight.shape
    assert wk == K, "weight must match x's feature dimension"

    out_dtype = x.dtype
    out_shape = jax.ShapeDtypeStruct((M, N), out_dtype)

    # One-time layout change to [K, N]: the in-kernel contraction then never touches
    # W's lane (minor) dim, so Mosaic never emits per-tile XLU transposes that would
    # contend with vmatmul pushes on the shared extended VLIW slots.
    # TODO(synk): in a real training setup store the parameter pre-transposed so this
    # is a parameter-level layout choice rather than a per-call XLA transpose.
    w_kn = weight if weight_is_transposed else weight.T

    if compute_dtype is not None and jnp.dtype(compute_dtype) != jnp.dtype(x.dtype):
        x_c = x.astype(compute_dtype)     # halves HBM traffic + VMEM tile footprint
        w_c = w_kn.astype(compute_dtype)
    else:
        x_c, w_c = x, w_kn

    isz_in = jnp.dtype(x_c.dtype).itemsize
    isz_out = jnp.dtype(out_dtype).itemsize
    budget = _vmem_budget_bytes()

    cost = pl.CostEstimate(
        flops=2 * M * N * K,
        transcendentals=0,
        bytes_accessed=(M * K + K * N) * isz_in + M * N * isz_out,
    )

    # ---------- Path A: genuinely tiny, latency-bound -> grid-less single block ----------
    total_bytes = (M * K + K * N) * isz_in + M * N * isz_out
    if tile_sizes is None and total_bytes <= small_path_max_bytes:
        return pl.pallas_call(
            _linear_noacc_kernel,
            out_shape=out_shape,
            in_specs=[
                pl.BlockSpec(memory_space=pltpu.MemorySpace.VMEM),
                pl.BlockSpec(memory_space=pltpu.MemorySpace.VMEM),
            ],
            out_specs=pl.BlockSpec(memory_space=pltpu.MemorySpace.VMEM),
            compiler_params=pltpu.CompilerParams(
                vmem_limit_bytes=int(min(budget, max(4 * total_bytes, 8 * _MIB))),
            ),
            cost_estimate=cost,
        )(x_c, w_c)

    # ---------- Path B: weight-resident in VMEM, stream x/out tiles over M ----------
    w_bytes = K * N * isz_in
    if tile_sizes is None and 2 * w_bytes <= budget // 2:
        # Prefer >= 2 grid steps so v7x's two TensorCores both get work ("parallel" M).
        tm_pref = min(512, M // 2) if M >= 16 else M
        tm_cands = _tile_candidates(M, max(tm_pref, 8), 8)
        tm = tm_cands[0]
        for cand in tm_cands:
            tm = cand
            if 2 * w_bytes + 2 * tm * (K * isz_in + N * isz_out) <= budget:
                break
        footprint = 2 * w_bytes + 2 * tm * (K * isz_in + N * isz_out)
        if footprint <= budget:
            return pl.pallas_call(
                _linear_noacc_kernel,
                out_shape=out_shape,
                grid=(M // tm,),
                in_specs=[
                    pl.BlockSpec((tm, K), lambda i: (i, 0)),
                    # Constant block index -> W is DMA'd from HBM exactly once and
                    # stays resident in VMEM for the whole grid.
                    pl.BlockSpec((K, N), lambda i: (0, 0)),
                ],
                out_specs=pl.BlockSpec((tm, N), lambda i: (i, 0)),
                compiler_params=pltpu.CompilerParams(
                    dimension_semantics=("parallel",),
                    vmem_limit_bytes=int(min(budget, footprint + 8 * _MIB)),
                ),
                cost_estimate=cost,
            )(x_c, w_c)
        # otherwise fall through to the fully tiled path

    # ---------- Path C: fully tiled 3-D (M, N, K) grid ----------
    if tile_sizes is None:
        tile_sizes = (512, 512, 1024)  # <~12 MiB double-buffered in f32; fits every gen
    tm_pref, tn_pref, tk_pref = tile_sizes

    tm_c = _tile_candidates(M, tm_pref, 8)
    tn_c = _tile_candidates(N, tn_pref, 128)
    tk_c = _tile_candidates(K, tk_pref, 128)
    tm, tn, tk = tm_c[0], tn_c[0], tk_c[0]

    def _footprint(a, b, c):
        # double-buffered x/w tiles + double-buffered out tile + f32 accumulator
        return 2 * (a * c + c * b) * isz_in + 2 * a * b * isz_out + a * b * 4

    # Shrink K first (cheapest for operand reuse), then N, then M, until it fits.
    for cand in tk_c:
        tk = cand
        if _footprint(tm, tn, tk) <= budget:
            break
    for cand in tn_c:
        tn = cand
        if _footprint(tm, tn, tk) <= budget:
            break
    for cand in tm_c:
        tm = cand
        if _footprint(tm, tn, tk) <= budget:
            break

    grid_m, grid_n, grid_k = M // tm, N // tn, K // tk
    vmem_limit = int(min(budget, _footprint(tm, tn, tk) + 8 * _MIB))

    if grid_k == 1:
        # Single reduction step: no accumulator scratch, no pl.when gating.
        return pl.pallas_call(
            _linear_noacc_kernel,
            out_shape=out_shape,
            grid=(grid_m, grid_n),
            in_specs=[
                pl.BlockSpec((tm, K), lambda i, j: (i, 0)),
                pl.BlockSpec((K, tn), lambda i, j: (0, j)),
            ],
            out_specs=pl.BlockSpec((tm, tn), lambda i, j: (i, j)),
            compiler_params=pltpu.CompilerParams(
                dimension_semantics=("parallel", "parallel"),
                vmem_limit_bytes=vmem_limit,
            ),
            cost_estimate=cost,
        )(x_c, w_c)

    return pl.pallas_call(
        _linear_acc_kernel,
        out_shape=out_shape,
        grid_spec=pltpu.PrefetchScalarGridSpec(
            num_scalar_prefetch=0,
            grid=(grid_m, grid_n, grid_k),
            in_specs=[
                pl.BlockSpec((tm, tk), lambda i, j, k: (i, k)),   # x tile  [tm, tk]
                pl.BlockSpec((tk, tn), lambda i, j, k: (k, j)),   # W tile  [tk, tn]
            ],
            out_specs=pl.BlockSpec((tm, tn), lambda i, j, k: (i, j)),
            scratch_shapes=[pltpu.VMEM((tm, tn), jnp.float32)],
        ),
        compiler_params=pltpu.CompilerParams(
            # M/N independent -> "parallel" (shards across v7x's 2 TCs); K reduces.
            dimension_semantics=("parallel", "parallel", "arbitrary"),
            vmem_limit_bytes=vmem_limit,
        ),
        cost_estimate=cost,
    )(x_c, w_c)


if __name__ == "__main__":
    key = jax.random.PRNGKey(0)
    kx, kw, k2x, k2w = jax.random.split(key, 4)

    # --- Small shapes consistent with the module (tiny, latency-bound -> Path A). ---
    batch, input_size, hidden_size = 8, 128, 128
    x = jax.random.normal(kx, (batch, input_size), dtype=jnp.float32)
    # Deterministic init mimicking nn.Linear default (uniform in +/- 1/sqrt(fan_in)).
    bound = 1.0 / (input_size ** 0.5)
    weight = jax.random.uniform(
        kw, (hidden_size, input_size), dtype=jnp.float32, minval=-bound, maxval=bound
    )

    out = jax.block_until_ready(single_parameter_module_forward(x, weight))
    ref = x @ weight.T
    assert out.shape == (batch, hidden_size)
    assert jnp.allclose(out, ref, atol=1e-3, rtol=1e-3)

    # Opt-in bf16 compute path (f32 accumulation) on the same tiny shapes.
    out_bf16 = jax.block_until_ready(
        single_parameter_module_forward(x, weight, compute_dtype=jnp.bfloat16)
    )
    assert out_bf16.dtype == x.dtype
    assert jnp.allclose(out_bf16, ref, atol=3e-2, rtol=3e-2)

    # --- Medium shape: weight-resident path (single W HBM pass, "parallel" M grid). ---
    M2, K2, N2 = 1024, 512, 512
    x2 = jax.random.normal(k2x, (M2, K2), dtype=jnp.float32)
    w2 = jax.random.normal(k2w, (N2, K2), dtype=jnp.float32) * (1.0 / K2 ** 0.5)
    out2 = jax.block_until_ready(single_parameter_module_forward(x2, w2))
    ref2 = x2 @ w2.T
    assert out2.shape == (M2, N2)
    assert jnp.allclose(out2, ref2, atol=2e-2, rtol=2e-2)

    # --- Explicit tiles: fully tiled 3-D path with f32 accumulator (grid 2x2x2). ---
    x3, w3 = x2[:256], w2[:256]          # [256, 512] x, [256, 512] weight (N=256, K=512)
    out3 = jax.block_until_ready(
        single_parameter_module_forward(x3, w3, tile_sizes=(128, 128, 256))
    )
    ref3 = x3 @ w3.T
    assert out3.shape == (256, 256)
    assert jnp.allclose(out3, ref3, atol=2e-2, rtol=2e-2)

    print("KERNEL_OK")
</pallas_src>

<mosaic_0001>
module attributes {stable_mosaic.version = 11 : i64} {
  func.func @_linear_noacc_kernel(%arg0: memref<8x128xf32, #tpu.memory_space<vmem>>, %arg1: memref<128x128xf32, #tpu.memory_space<vmem>>, %arg2: memref<8x128xf32, #tpu.memory_space<vmem>>) attributes {dimension_semantics = [], scalar_prefetch = 0 : i64, scratch_operands = 0 : i64, tpu.core_type = #tpu.core_type<tc>} {
    %c0 = arith.constant 0 : index
    %c0_0 = arith.constant 0 : index
    %0 = vector.load %arg0[%c0, %c0_0] : memref<8x128xf32, #tpu.memory_space<vmem>>, vector<8x128xf32>
    %c0_1 = arith.constant 0 : index
    %c0_2 = arith.constant 0 : index
    %1 = vector.load %arg1[%c0_1, %c0_2] : memref<128x128xf32, #tpu.memory_space<vmem>>, vector<128x128xf32>
    %cst = arith.constant dense<0.000000e+00> : vector<8x128xf32>
    %2 = tpu.matmul %0, %1, %cst {dimension_numbers = #tpu.dot_dimension_numbers<[1], [0], [0], [1], [0, 0, 1, 1], [], []>} : vector<8x128xf32>, vector<128x128xf32>, vector<8x128xf32> -> vector<8x128xf32>
    %c0_3 = arith.constant 0 : index
    %c0_4 = arith.constant 0 : index
    %3 = vector.load %arg2[%c0_3, %c0_4] : memref<8x128xf32, #tpu.memory_space<vmem>>, vector<8x128xf32>
    tpu.vector_store %arg2[%c0_3, %c0_4], %2 {strides = array<i32>} : memref<8x128xf32, #tpu.memory_space<vmem>>, vector<8x128xf32>,
    return
  }
}

</mosaic_0001>

<llo_original>
// kernel: tpu_custom_call.1
$region0: #{tpu_custom_call.1}
  #allocation0 [shape = 'u32[]', space=smem, size = 0x4, offset = 0x4, fixed_abs, tag = 'smem constant byte address 0x4 - core index']
  #allocation1 [shape = 'u32[72,128]{1,0:T(1,128)}', space=vmem, size = 0x9000, scoped, tag = 'internal scratch']
  %s0 = inlined_call_operand.hbm [shape: f32[8,128], index: 0, kind: input, shape index: {}]
  %s1 = inlined_call_operand.hbm [shape: f32[128,128], index: 1, kind: input, shape index: {}]
  %s2 = inlined_call_operand.hbm [shape: f32[8,128], index: 2, kind: output, shape index: {}]
  %s3 = sld [smem:[#allocation0]]
  $region26: #{tpu_custom_call.1} parent=0
    _
  %s5 = ssub.s32 1, %s3
  %s6 = scalar_select 0, %s5, %s3
  $region1: #{tpu_custom_call.1} parent=0
    #allocation2 [shape = 'u8[4096]{0}', space=vmem, size = 0x1000, scoped, tag = 'input window, operand 0, single buffered']
    #allocation3 [shape = 's32[1]{0}', space=sflag, size = 0x4, scoped, tag = 'scoped memory for tpu_custom_call.1']
    #allocation4 [shape = 's32[1]{0}', space=sflag, size = 0x4, scoped, tag = 'scoped memory for tpu_custom_call.1']
    #allocation5 [shape = 'u8[65536]{0}', space=vmem, size = 0x10000, scoped, tag = 'input window, operand 1, single buffered']
    #allocation6 [shape = 's32[1]{0}', space=sflag, size = 0x4, scoped, tag = 'scoped memory for tpu_custom_call.1']
    #allocation7 [shape = 'u8[4096]{0}', space=vmem, size = 0x1000, scoped, tag = 'output window, operand 0, single buffered']
    %7 = vsyncpa [#allocation3], 0
    %8 = vsyncpa [#allocation6], 0
    %9 = vsyncpa [#allocation4], 0
    // Predicated region
    $region2: #{tpu_custom_call.1} parent=1 // pred_check
      _
    $region3: #{tpu_custom_call.1} parent=1 // pred_check_branch
      %11 = sbr.rel (0) target = $region5
    $region4: #{tpu_custom_call.1} parent=1 // pred_region
      %13 = vsyncadd [#allocation3], 0
      %s15 = sshll.u32 %s0, 4
      %s16 = int_to_ptr.hbm [resolvable:$true] %s15
      %s17 = sshll.u32 [#allocation2], 4
      %s18 = int_to_ptr.vmem [resolvable:$true] %s17
      %20 = dma.hbm_to_vmem [thread:$0]  %s16, 128, %s18, [#allocation3]
    $region5: #{tpu_custom_call.1} parent=1 // pred_fallthru
      _
    // Predicated region
    $region6: #{tpu_custom_call.1} parent=1 // pred_check
      _
    $region7: #{tpu_custom_call.1} parent=1 // pred_check_branch
      %22 = sbr.rel (0) target = $region9
    $region8: #{tpu_custom_call.1} parent=1 // pred_region
      %24 = vsyncadd [#allocation6], 0
      %s25 = sshll.u32 %s1, 4
      %s26 = int_to_ptr.hbm [resolvable:$true] %s25
      %s27 = sshll.u32 [#allocation5], 4
      %s28 = int_to_ptr.vmem [resolvable:$true] %s27
      %33 = dma.hbm_to_vmem [thread:$0]  %s26, 2048, %s28, [#allocation6], 128, 128, 8
    $region9: #{tpu_custom_call.1} parent=1 // pred_fallthru
      _
    // Predicated region
    $region10: #{tpu_custom_call.1} parent=1 // pred_check
      _
    $region11: #{tpu_custom_call.1} parent=1 // pred_check_branch
      %35 = sbr.rel (0) target = $region13
    $region12: #{tpu_custom_call.1} parent=1 // pred_region
      %37 = dma.done [#allocation3], 128
    $region13: #{tpu_custom_call.1} parent=1 // pred_fallthru
      _
    // Predicated region
    $region14: #{tpu_custom_call.1} parent=1 // pred_check
      _
    $region15: #{tpu_custom_call.1} parent=1 // pred_check_branch
      %39 = sbr.rel (0) target = $region17
    $region16: #{tpu_custom_call.1} parent=1 // pred_region
      %41 = dma.done [#allocation6], 2048
    $region17: #{tpu_custom_call.1} parent=1 // pred_fallthru
      _
    %v42 = vld [vmem:[#allocation2] sm:$0xff]
    %v43 = vld [vmem:[#allocation5] sm:$0xff]
    %v44 = vld [vmem:[#allocation5 + $0x8] sm:$0xff]
    %v45 = vld [vmem:[#allocation5 + $0x10] sm:$0xff]
    %v46 = vld [vmem:[#allocation5 + $0x18] sm:$0xff]
    %v47 = vld [vmem:[#allocation5 + $0x20] sm:$0xff]
    %v48 = vld [vmem:[#allocation5 + $0x28] sm:$0xff]
    %v49 = vld [vmem:[#allocation5 + $0x30] sm:$0xff]
    %v50 = vld [vmem:[#allocation5 + $0x38] sm:$0xff]
    %v51 = vld [vmem:[#allocation5 + $0x40] sm:$0xff]
    %v52 = vld [vmem:[#allocation5 + $0x48] sm:$0xff]
    %v53 = vld [vmem:[#allocation5 + $0x50] sm:$0xff]
    %v54 = vld [vmem:[#allocation5 + $0x58] sm:$0xff]
    %v55 = vld [vmem:[#allocation5 + $0x60] sm:$0xff]
    %v56 = vld [vmem:[#allocation5 + $0x68] sm:$0xff]
    %v57 = vld [vmem:[#allocation5 + $0x70] sm:$0xff]
    %v58 = vld [vmem:[#allocation5 + $0x78] sm:$0xff]
    %59 = vmatpush.msra.mxu0 %v58
    %60 = vmatpush.msra.mxu0 %v57
    %61 = vmatpush.msra.mxu0 %v56
    %62 = vmatpush.msra.mxu0 %v55
    %63 = vmatpush.msra.mxu0 %v54
    %64 = vmatpush.msra.mxu0 %v53
    %65 = vmatpush.msra.mxu0 %v52
    %66 = vmatpush.msra.mxu0 %v51
    %67 = vmatpush.msra.mxu0 %v50
    %68 = vmatpush.msra.mxu0 %v49
    %69 = vmatpush.msra.mxu0 %v48
    %70 = vmatpush.msra.mxu0 %v47
    %71 = vmatpush.msra.mxu0 %v46
    %72 = vmatpush.msra.mxu0 %v45
    %73 = vmatpush.msra.mxu0 %v44
    %74 = vmatpush.msra.mxu0 %v43
    %75 = vmatmul.f32.gmra.mxu0 %v42
    %v76 = vpop.f32.mrf.mxu0
    %v77 = vadd.f32 0.0, %v76
    %78 = vdwg.mxu0
    %79 = vst [vmem:[#allocation7] sm:$0xff] %v77
    // Predicated region
    $region18: #{tpu_custom_call.1} parent=1 // pred_check
      _
    $region19: #{tpu_custom_call.1} parent=1 // pred_check_branch
      %81 = sbr.rel (0) target = $region21
    $region20: #{tpu_custom_call.1} parent=1 // pred_region
      %83 = vsyncadd [#allocation4], 0
      %s85 = sshll.u32 [#allocation7], 4
      %s86 = int_to_ptr.vmem [resolvable:$true] %s85
      %s87 = sshll.u32 %s2, 4
      %s88 = int_to_ptr.hbm [resolvable:$true] %s87
      %90 = dma.vmem_to_hbm [thread:$0]  %s86, 128, %s88, [#allocation4]
    $region21: #{tpu_custom_call.1} parent=1 // pred_fallthru
      _
    // Predicated region
    $region22: #{tpu_custom_call.1} parent=1 // pred_check
      _
    $region23: #{tpu_custom_call.1} parent=1 // pred_check_branch
      %92 = sbr.rel (0) target = $region25
    $region24: #{tpu_custom_call.1} parent=1 // pred_region
      %94 = dma.done [#allocation4], 128
    $region25: #{tpu_custom_call.1} parent=1 // pred_fallthru
      _
    %95 = vsyncpa [#allocation3], 1
    %96 = vsyncpa [#allocation6], 1
    %97 = vsyncpa [#allocation4], 1

</llo_original>
